<compile_context>
chip_gen: v6e
topology: v6e:2x2x1
jax: 0.10.0
libtpu: 0.0.40
codegen_flags: <defaults>
</compile_context>

<pallas_src>
import jax
import jax.numpy as jnp
from jax.experimental import pallas as pl
from jax.experimental.pallas import tpu as pltpu


def _critic_kernel(x_ref, w1_ref, b1_ref, w2_ref, b2_ref, w3_ref, b3_ref, o_ref):
    # x_ref: (TB, pack*obs_pad) f32 tile of lane-packed observations.
    x = x_ref[...].astype(jnp.bfloat16)

    # Layer 1: x @ W1_blk + b1  (MXU, f32 accumulate), Tanh in f32.
    h = jnp.dot(x, w1_ref[...], preferred_element_type=jnp.float32) + b1_ref[...]
    h = jnp.tanh(h)

    # Layer 2.
    h = jnp.dot(h.astype(jnp.bfloat16), w2_ref[...],
                preferred_element_type=jnp.float32) + b2_ref[...]
    h = jnp.tanh(h)

    # Layer 3 (value head, one value per packed row slot) + Identity.
    out = jnp.dot(h.astype(jnp.bfloat16), w3_ref[...],
                  preferred_element_type=jnp.float32) + b3_ref[...]
    o_ref[...] = out.astype(o_ref.dtype)


def _round_up(x, m):
    return (x + m - 1) // m * m


def _choose_packing(obs, hidden, max_blk_width=1024):
    """Pick how many batch rows to pack into the 128-lane dimension."""
    if obs > 128:
        return 1, _round_up(obs, 128)
    obs_pad = 1
    while obs_pad < obs:
        obs_pad *= 2            # obs_pad divides 128
    pack = 128 // obs_pad
    # Keep the replicated hidden width (and W2_blk) a sane size.
    while pack > 1 and pack * hidden > max_blk_width:
        pack //= 2
    return pack, obs_pad


def pack_critic_params(params):
    """Build the block-diagonal, lane-packed (and bf16) weights once."""
    w1, b1, w2, b2, w3, b3 = params
    obs, hidden = int(w1.shape[0]), int(w1.shape[1])
    pack, obs_pad = _choose_packing(obs, hidden)

    eye = jnp.eye(pack, dtype=jnp.float32)
    w1p = jnp.pad(jnp.asarray(w1, jnp.float32), ((0, obs_pad - obs), (0, 0)))
    w1b = jnp.kron(eye, w1p).astype(jnp.bfloat16)                    # (pack*obs_pad, pack*hidden)
    w2b = jnp.kron(eye, jnp.asarray(w2, jnp.float32)).astype(jnp.bfloat16)  # (pack*h, pack*h)
    w3b = jnp.kron(eye, jnp.asarray(w3, jnp.float32)).astype(jnp.bfloat16)  # (pack*h, pack)

    b1b = jnp.tile(jnp.asarray(b1, jnp.float32).reshape(1, hidden), (1, pack))
    b2b = jnp.tile(jnp.asarray(b2, jnp.float32).reshape(1, hidden), (1, pack))
    b3b = jnp.tile(jnp.asarray(b3, jnp.float32).reshape(1, 1), (1, pack))

    return dict(pack=pack, obs=obs, obs_pad=obs_pad, hidden=hidden,
                w1=w1b, b1=b1b, w2=w2b, b2=b2b, w3=w3b, b3=b3b)


def critic_forward(ob, packed, *, batch_tile=16384):
    """ob: (..., obs_size) -> (..., 1) f32 state values.

    `batch_tile` is the only tunable: original batch rows per grid step.  It is
    rounded to the 8*pack sublane granule, capped by the (padded) batch, and —
    when the batch is large enough — capped at ~half the batch so the parallel
    grid axis has at least two steps (v7x megacore).
    """
    pack, obs, obs_pad, hidden = (packed["pack"], packed["obs"],
                                  packed["obs_pad"], packed["hidden"])
    lane = pack * obs_pad
    n_hid = pack * hidden
    granule = 8 * pack          # original rows per packed sublane group

    lead_shape = ob.shape[:-1]
    x = jnp.asarray(ob, jnp.float32).reshape(-1, obs)
    B = int(x.shape[0])

    min_rows = _round_up(max(B, 1), granule)
    bt = _round_up(min(max(int(batch_tile), granule), min_rows), granule)
    # Guarantee >=2 grid steps when the batch is big enough (v7x: 2 TensorCores).
    half = _round_up(-(-min_rows // 2), granule)
    if min_rows >= 2 * granule and bt > half:
        bt = half
    grid_steps = -(-min_rows // bt)
    padded_rows = grid_steps * bt

    # Pad batch + obs, then pack `pack` rows into the lane dimension.
    x = jnp.pad(x, ((0, padded_rows - B), (0, obs_pad - obs)))
    xp = x.reshape(padded_rows // pack, lane)

    tb = bt // pack             # packed rows per tile (multiple of 8)
    n_packed = padded_rows // pack

    # Advisory cost estimate (actual blocked-matmul dims).
    flops = 2 * n_packed * (lane * n_hid + n_hid * n_hid + n_hid * pack)
    transcendentals = 2 * n_packed * n_hid
    bytes_accessed = (4 * n_packed * (lane + pack)                       # x in, values out
                      + 2 * (lane * n_hid + n_hid * n_hid + n_hid * pack)  # bf16 weights
                      + 4 * (2 * n_hid + pack))                          # f32 biases

    out = pl.pallas_call(
        _critic_kernel,
        out_shape=jax.ShapeDtypeStruct((n_packed, pack), jnp.float32),
        grid_spec=pltpu.PrefetchScalarGridSpec(
            num_scalar_prefetch=0,
            grid=(grid_steps,),
            in_specs=[
                pl.BlockSpec((tb, lane), lambda i: (i, 0)),        # packed x tile
                pl.BlockSpec((lane, n_hid), lambda i: (0, 0)),     # W1 block-diag (bf16)
                pl.BlockSpec((1, n_hid), lambda i: (0, 0)),        # b1 tiled
                pl.BlockSpec((n_hid, n_hid), lambda i: (0, 0)),    # W2 block-diag (bf16)
                pl.BlockSpec((1, n_hid), lambda i: (0, 0)),        # b2 tiled
                pl.BlockSpec((n_hid, pack), lambda i: (0, 0)),     # W3 block-diag (bf16)
                pl.BlockSpec((1, pack), lambda i: (0, 0)),         # b3 tiled
            ],
            out_specs=pl.BlockSpec((tb, pack), lambda i: (i, 0)),
        ),
        compiler_params=pltpu.CompilerParams(
            dimension_semantics=("parallel",),
            vmem_limit_bytes=32 * 1024 * 1024,
        ),
        cost_estimate=pl.CostEstimate(
            flops=int(flops),
            transcendentals=int(transcendentals),
            bytes_accessed=int(bytes_accessed),
        ),
    )(xp, packed["w1"], packed["b1"], packed["w2"], packed["b2"],
      packed["w3"], packed["b3"])

    # Unpack lanes back to one value per original row and drop padding.
    out = out.reshape(padded_rows, 1)[:B]
    return out.reshape(lead_shape + (1,))


def init_critic_params(key, observation_size, hidden_dim):
    """Deterministic synthetic init (PyTorch-style uniform fan-in bounds)."""
    ks = jax.random.split(key, 6)

    def linear(kw, kb, fan_in, fan_out):
        bound = 1.0 / jnp.sqrt(fan_in)
        w = jax.random.uniform(kw, (fan_in, fan_out), jnp.float32, -bound, bound)
        b = jax.random.uniform(kb, (1, fan_out), jnp.float32, -bound, bound)
        return w, b

    w1, b1 = linear(ks[0], ks[1], observation_size, hidden_dim)
    w2, b2 = linear(ks[2], ks[3], hidden_dim, hidden_dim)
    w3, b3 = linear(ks[4], ks[5], hidden_dim, 1)
    return (w1, b1, w2, b2, w3, b3)


if __name__ == "__main__":
    key = jax.random.PRNGKey(0)
    k_params, k_ob, k_ob2 = jax.random.split(key, 3)

    observation_size = 16
    hidden_dim = 32
    batch = 8

    params = init_critic_params(k_params, observation_size, hidden_dim)
    packed = pack_critic_params(params)   # built once; reused for every forward

    def reference(ob):
        w1, b1, w2, b2, w3, b3 = params
        h = jnp.tanh(ob @ w1 + b1)
        h = jnp.tanh(h @ w2 + b2)
        return h @ w3 + b3

    # bf16 MXU operands (f32 accumulation) => tolerances loosened vs pure-f32.
    ATOL = 3e-2
    RTOL = 3e-2

    # Small single-tile case.
    ob = jax.random.normal(k_ob, (batch, observation_size), dtype=jnp.float32)
    value = critic_forward(ob, packed)
    jax.block_until_ready(value)
    assert value.shape == (batch, 1)
    assert jnp.allclose(value, reference(ob), atol=ATOL, rtol=RTOL)

    # Multi-dim leading shape, default tile (>=2 grid steps => both v7x cores).
    ob2 = jax.random.normal(k_ob2, (3, 100, observation_size), dtype=jnp.float32)
    value2 = critic_forward(ob2, packed)
    jax.block_until_ready(value2)
    assert value2.shape == (3, 100, 1)
    assert jnp.allclose(value2, reference(ob2), atol=ATOL, rtol=RTOL)

    # Small explicit tile -> multi-step grid path.
    value3 = critic_forward(ob2, packed, batch_tile=64)
    jax.block_until_ready(value3)
    assert value3.shape == (3, 100, 1)
    assert jnp.allclose(value3, reference(ob2), atol=ATOL, rtol=RTOL)

    print("KERNEL_OK")
</pallas_src>

<mosaic_0001>
module attributes {stable_mosaic.version = 11 : i64} {
  func.func @_critic_kernel(%arg0: i32, %arg1: memref<8x128xf32, #tpu.memory_space<vmem>>, %arg2: memref<128x256xbf16, #tpu.memory_space<vmem>>, %arg3: memref<1x256xf32, #tpu.memory_space<vmem>>, %arg4: memref<256x256xbf16, #tpu.memory_space<vmem>>, %arg5: memref<1x256xf32, #tpu.memory_space<vmem>>, %arg6: memref<256x8xbf16, #tpu.memory_space<vmem>>, %arg7: memref<1x8xf32, #tpu.memory_space<vmem>>, %arg8: memref<8x8xf32, #tpu.memory_space<vmem>>) attributes {dimension_semantics = [#tpu.dimension_semantics<parallel>], iteration_bounds = array<i64: 1>, scalar_prefetch = 0 : i64, scratch_operands = 0 : i64, tpu.core_type = #tpu.core_type<tc>, window_params = [{transform_indices = @transform_0, window_bounds = array<i64: 8, 128>}, {pipeline_mode = #tpu.pipeline_mode<synchronous>, transform_indices = @transform_1, window_bounds = array<i64: 128, 256>}, {pipeline_mode = #tpu.pipeline_mode<synchronous>, transform_indices = @transform_2, window_bounds = array<i64: 1, 256>}, {pipeline_mode = #tpu.pipeline_mode<synchronous>, transform_indices = @transform_3, window_bounds = array<i64: 256, 256>}, {pipeline_mode = #tpu.pipeline_mode<synchronous>, transform_indices = @transform_4, window_bounds = array<i64: 1, 256>}, {pipeline_mode = #tpu.pipeline_mode<synchronous>, transform_indices = @transform_5, window_bounds = array<i64: 256, 8>}, {pipeline_mode = #tpu.pipeline_mode<synchronous>, transform_indices = @transform_6, window_bounds = array<i64: 1, 8>}, {transform_indices = @transform_7, window_bounds = array<i64: 8, 8>}]} {
    %c0 = arith.constant 0 : index
    %c0_0 = arith.constant 0 : index
    %0 = vector.load %arg1[%c0, %c0_0] : memref<8x128xf32, #tpu.memory_space<vmem>>, vector<8x128xf32>
    %1 = arith.truncf %0 : vector<8x128xf32> to vector<8x128xbf16>
    %c0_1 = arith.constant 0 : index
    %c0_2 = arith.constant 0 : index
    %2 = vector.load %arg2[%c0_1, %c0_2] : memref<128x256xbf16, #tpu.memory_space<vmem>>, vector<128x256xbf16>
    %cst = arith.constant dense<0.000000e+00> : vector<8x256xf32>
    %3 = tpu.matmul %1, %2, %cst {dimension_numbers = #tpu.dot_dimension_numbers<[1], [0], [0], [1], [0, 0, 1, 1], [], []>} : vector<8x128xbf16>, vector<128x256xbf16>, vector<8x256xf32> -> vector<8x256xf32>
    %c0_3 = arith.constant 0 : index
    %c0_4 = arith.constant 0 : index
    %4 = vector.load %arg3[%c0_3, %c0_4] : memref<1x256xf32, #tpu.memory_space<vmem>>, vector<1x256xf32>
    %5 = vector.broadcast %4 : vector<1x256xf32> to vector<8x256xf32>
    %6 = arith.addf %3, %5 : vector<8x256xf32>
    %7 = math.tanh %6 : vector<8x256xf32>
    %8 = arith.truncf %7 : vector<8x256xf32> to vector<8x256xbf16>
    %c0_5 = arith.constant 0 : index
    %c0_6 = arith.constant 0 : index
    %9 = vector.load %arg4[%c0_5, %c0_6] : memref<256x256xbf16, #tpu.memory_space<vmem>>, vector<256x256xbf16>
    %cst_7 = arith.constant dense<0.000000e+00> : vector<8x256xf32>
    %10 = tpu.matmul %8, %9, %cst_7 {dimension_numbers = #tpu.dot_dimension_numbers<[1], [0], [0], [1], [0, 0, 1, 1], [], []>} : vector<8x256xbf16>, vector<256x256xbf16>, vector<8x256xf32> -> vector<8x256xf32>
    %c0_8 = arith.constant 0 : index
    %c0_9 = arith.constant 0 : index
    %11 = vector.load %arg5[%c0_8, %c0_9] : memref<1x256xf32, #tpu.memory_space<vmem>>, vector<1x256xf32>
    %12 = vector.broadcast %11 : vector<1x256xf32> to vector<8x256xf32>
    %13 = arith.addf %10, %12 : vector<8x256xf32>
    %14 = math.tanh %13 : vector<8x256xf32>
    %15 = arith.truncf %14 : vector<8x256xf32> to vector<8x256xbf16>
    %c0_10 = arith.constant 0 : index
    %c0_11 = arith.constant 0 : index
    %16 = vector.load %arg6[%c0_10, %c0_11] : memref<256x8xbf16, #tpu.memory_space<vmem>>, vector<256x8xbf16>
    %cst_12 = arith.constant dense<0.000000e+00> : vector<8x8xf32>
    %17 = tpu.matmul %15, %16, %cst_12 {dimension_numbers = #tpu.dot_dimension_numbers<[1], [0], [0], [1], [0, 0, 1, 1], [], []>} : vector<8x256xbf16>, vector<256x8xbf16>, vector<8x8xf32> -> vector<8x8xf32>
    %c0_13 = arith.constant 0 : index
    %c0_14 = arith.constant 0 : index
    %18 = vector.load %arg7[%c0_13, %c0_14] : memref<1x8xf32, #tpu.memory_space<vmem>>, vector<1x8xf32>
    %19 = vector.broadcast %18 : vector<1x8xf32> to vector<8x8xf32>
    %20 = arith.addf %17, %19 : vector<8x8xf32>
    %c0_15 = arith.constant 0 : index
    %c0_16 = arith.constant 0 : index
    %21 = vector.load %arg8[%c0_15, %c0_16] : memref<8x8xf32, #tpu.memory_space<vmem>>, vector<8x8xf32>
    tpu.vector_store %arg8[%c0_15, %c0_16], %20 {strides = array<i32>} : memref<8x8xf32, #tpu.memory_space<vmem>>, vector<8x8xf32>,
    return
  }
  func.func @transform_0(%arg0: i32) -> (i32, i32) {
    %c0_i32 = arith.constant 0 : i32
    %c0_i32_0 = arith.constant 0 : i32
    return %arg0, %c0_i32 : i32, i32
  }
  func.func @transform_1(%arg0: i32) -> (i32, i32) {
    %c0_i32 = arith.constant 0 : i32
    %c0_i32_0 = arith.constant 0 : i32
    %c0_i32_1 = arith.constant 0 : i32
    return %c0_i32, %c0_i32_0 : i32, i32
  }
  func.func @transform_2(%arg0: i32) -> (i32, i32) {
    %c0_i32 = arith.constant 0 : i32
    %c0_i32_0 = arith.constant 0 : i32
    %c0_i32_1 = arith.constant 0 : i32
    return %c0_i32, %c0_i32_0 : i32, i32
  }
  func.func @transform_3(%arg0: i32) -> (i32, i32) {
    %c0_i32 = arith.constant 0 : i32
    %c0_i32_0 = arith.constant 0 : i32
    %c0_i32_1 = arith.constant 0 : i32
    return %c0_i32, %c0_i32_0 : i32, i32
  }
  func.func @transform_4(%arg0: i32) -> (i32, i32) {
    %c0_i32 = arith.constant 0 : i32
    %c0_i32_0 = arith.constant 0 : i32
    %c0_i32_1 = arith.constant 0 : i32
    return %c0_i32, %c0_i32_0 : i32, i32
  }
  func.func @transform_5(%arg0: i32) -> (i32, i32) {
    %c0_i32 = arith.constant 0 : i32
    %c0_i32_0 = arith.constant 0 : i32
    %c0_i32_1 = arith.constant 0 : i32
    return %c0_i32, %c0_i32_0 : i32, i32
  }
  func.func @transform_6(%arg0: i32) -> (i32, i32) {
    %c0_i32 = arith.constant 0 : i32
    %c0_i32_0 = arith.constant 0 : i32
    %c0_i32_1 = arith.constant 0 : i32
    return %c0_i32, %c0_i32_0 : i32, i32
  }
  func.func @transform_7(%arg0: i32) -> (i32, i32) {
    %c0_i32 = arith.constant 0 : i32
    %c0_i32_0 = arith.constant 0 : i32
    return %arg0, %c0_i32 : i32, i32
  }
}

</mosaic_0001>

<llo_original>
// kernel: tpu_custom_call.1
$region0: #{tpu_custom_call.1}
  #allocation0 [shape = 'u32[]', space=smem, size = 0x4, offset = 0x4, fixed_abs, tag = 'smem constant byte address 0x4 - core index']
  #allocation1 [shape = 'u32[144,128]{1,0:T(1,128)}', space=vmem, size = 0x12000, scoped, tag = 'internal scratch']
  %s0 = inlined_call_operand.vmem [shape: f32[8,128], index: 0, kind: input, shape index: {}]
  %s1 = inlined_call_operand.vmem [shape: bf16[128,256], index: 1, kind: input, shape index: {}]
  %s2 = inlined_call_operand.hbm [shape: f32[1,256], index: 2, kind: input, shape index: {}]
  %s3 = inlined_call_operand.hbm [shape: bf16[256,256], index: 3, kind: input, shape index: {}]
  %s4 = inlined_call_operand.hbm [shape: f32[1,256], index: 4, kind: input, shape index: {}]
  %s5 = inlined_call_operand.vmem [shape: bf16[256,8], index: 5, kind: input, shape index: {}]
  %s6 = inlined_call_operand.vmem [shape: f32[1,8], index: 6, kind: input, shape index: {}]
  %s7 = inlined_call_operand.hbm [shape: f32[8,8], index: 7, kind: output, shape index: {}]
  %s8 = sld [smem:[#allocation0]]
  $region50: #{tpu_custom_call.1} parent=0
    _
  %s10 = ssub.s32 1, %s8
  %s11 = scalar_select 0, %s10, %s8
  $region1: #{tpu_custom_call.1} parent=0
    #allocation2 [shape = 'u8[1024]{0}', space=vmem, size = 0x400, scoped, tag = 'input window, operand 2, single buffered']
    #allocation3 [shape = 's32[1]{0}', space=sflag, size = 0x4, scoped, tag = 'scoped memory for tpu_custom_call.1']
    #allocation4 [shape = 's32[1]{0}', space=sflag, size = 0x4, scoped, tag = 'scoped memory for tpu_custom_call.1']
    #allocation5 [shape = 'u8[131072]{0}', space=vmem, size = 0x20000, scoped, tag = 'input window, operand 3, single buffered']
    #allocation6 [shape = 's32[1]{0}', space=sflag, size = 0x4, scoped, tag = 'scoped memory for tpu_custom_call.1']
    #allocation7 [shape = 'u8[1024]{0}', space=vmem, size = 0x400, scoped, tag = 'input window, operand 4, single buffered']
    #allocation8 [shape = 'u8[4096]{0}', space=vmem, size = 0x1000, scoped, tag = 'output window, operand 0, single buffered']
    %12 = vsyncpa [#allocation3], 0
    %13 = vsyncpa [#allocation6], 0
    %14 = vsyncpa [#allocation4], 0
    // Predicated region
    $region2: #{tpu_custom_call.1} parent=1 // pred_check
      _
    $region3: #{tpu_custom_call.1} parent=1 // pred_check_branch
      %16 = sbr.rel (0) target = $region5
    $region4: #{tpu_custom_call.1} parent=1 // pred_region
      _
    $region5: #{tpu_custom_call.1} parent=1 // pred_fallthru
      _
    // Predicated region
    $region6: #{tpu_custom_call.1} parent=1 // pred_check
      _
    $region7: #{tpu_custom_call.1} parent=1 // pred_check_branch
      %18 = sbr.rel (0) target = $region9
    $region8: #{tpu_custom_call.1} parent=1 // pred_region
      _
    $region9: #{tpu_custom_call.1} parent=1 // pred_fallthru
      _
    // Predicated region
    $region10: #{tpu_custom_call.1} parent=1 // pred_check
      _
    $region11: #{tpu_custom_call.1} parent=1 // pred_check_branch
      %20 = sbr.rel (0) target = $region13
    $region12: #{tpu_custom_call.1} parent=1 // pred_region
      %s22 = ssub.s32 32, 32
      %23 = vsyncadd [#allocation3], %s22
      %s25 = sshll.u32 [#allocation2], 4
      %s26 = int_to_ptr.vmem [resolvable:$true] %s25
      %28 = dma.hbm_to_vmem [thread:$0]  %s2, 32, %s26, [#allocation3]
    $region13: #{tpu_custom_call.1} parent=1 // pred_fallthru
      _
    // Predicated region
    $region14: #{tpu_custom_call.1} parent=1 // pred_check
      _
    $region15: #{tpu_custom_call.1} parent=1 // pred_check_branch
      %30 = sbr.rel (0) target = $region17
    $region16: #{tpu_custom_call.1} parent=1 // pred_region
      %s32 = ssub.s32 4096, 4096
      %33 = vsyncadd [#allocation6], %s32
      %s34 = sshll.u32 [#allocation5], 4
      %s35 = int_to_ptr.vmem [resolvable:$true] %s34
      %40 = dma.hbm_to_vmem [thread:$0]  %s3, 4096, %s35, [#allocation6], 128, 128, 8
    $region17: #{tpu_custom_call.1} parent=1 // pred_fallthru
      _
    // Predicated region
    $region18: #{tpu_custom_call.1} parent=1 // pred_check
      _
    $region19: #{tpu_custom_call.1} parent=1 // pred_check_branch
      %42 = sbr.rel (0) target = $region21
    $region20: #{tpu_custom_call.1} parent=1 // pred_region
      %s44 = ssub.s32 32, 32
      %45 = vsyncadd [#allocation6], %s44
      %s47 = sshll.u32 [#allocation7], 4
      %s48 = int_to_ptr.vmem [resolvable:$true] %s47
      %50 = dma.hbm_to_vmem [thread:$0]  %s4, 32, %s48, [#allocation6]
    $region21: #{tpu_custom_call.1} parent=1 // pred_fallthru
      _
    // Predicated region
    $region22: #{tpu_custom_call.1} parent=1 // pred_check
      _
    $region23: #{tpu_custom_call.1} parent=1 // pred_check_branch
      %52 = sbr.rel (0) target = $region25
    $region24: #{tpu_custom_call.1} parent=1 // pred_region
      _
    $region25: #{tpu_custom_call.1} parent=1 // pred_fallthru
      _
    // Predicated region
    $region26: #{tpu_custom_call.1} parent=1 // pred_check
      _
    $region27: #{tpu_custom_call.1} parent=1 // pred_check_branch
      %54 = sbr.rel (0) target = $region29
    $region28: #{tpu_custom_call.1} parent=1 // pred_region
      _
    $region29: #{tpu_custom_call.1} parent=1 // pred_fallthru
      _
    // Predicated region
    $region30: #{tpu_custom_call.1} parent=1 // pred_check
      _
    $region31: #{tpu_custom_call.1} parent=1 // pred_check_branch
      %56 = sbr.rel (0) target = $region33
    $region32: #{tpu_custom_call.1} parent=1 // pred_region
      %57 = dma.done [#allocation3], 32
    $region33: #{tpu_custom_call.1} parent=1 // pred_fallthru
      _
    // Predicated region
    $region34: #{tpu_custom_call.1} parent=1 // pred_check
      _
    $region35: #{tpu_custom_call.1} parent=1 // pred_check_branch
      %59 = sbr.rel (0) target = $region37
    $region36: #{tpu_custom_call.1} parent=1 // pred_region
      %60 = dma.done [#allocation6], 4096
    $region37: #{tpu_custom_call.1} parent=1 // pred_fallthru
      _
    // Predicated region
    $region38: #{tpu_custom_call.1} parent=1 // pred_check
      _
    $region39: #{tpu_custom_call.1} parent=1 // pred_check_branch
      %62 = sbr.rel (0) target = $region41
    $region40: #{tpu_custom_call.1} parent=1 // pred_region
      %63 = dma.done [#allocation6], 32
    $region41: #{tpu_custom_call.1} parent=1 // pred_fallthru
      _
    %v65 = vld [vmem:[%s0] sm:$0xff]
    %v66 = vpack.c.bf16 %v65, %v65
    %v67 = vld [vmem:[%s1] sm:$0xff]
    %v68 = vld [vmem:[%s1 + $0x8] sm:$0xff]
    %v69 = vld [vmem:[%s1 + $0x10] sm:$0xff]
    %v70 = vld [vmem:[%s1 + $0x18] sm:$0xff]
    %v71 = vld [vmem:[%s1 + $0x20] sm:$0xff]
    %v72 = vld [vmem:[%s1 + $0x28] sm:$0xff]
    %v73 = vld [vmem:[%s1 + $0x30] sm:$0xff]
    %v74 = vld [vmem:[%s1 + $0x38] sm:$0xff]
    %v75 = vld [vmem:[%s1 + $0x40] sm:$0xff]
    %v76 = vld [vmem:[%s1 + $0x48] sm:$0xff]
    %v77 = vld [vmem:[%s1 + $0x50] sm:$0xff]
    %v78 = vld [vmem:[%s1 + $0x58] sm:$0xff]
    %v79 = vld [vmem:[%s1 + $0x60] sm:$0xff]
    %v80 = vld [vmem:[%s1 + $0x68] sm:$0xff]
    %v81 = vld [vmem:[%s1 + $0x70] sm:$0xff]
    %v82 = vld [vmem:[%s1 + $0x78] sm:$0xff]
    %v83 = vld [vmem:[#allocation2] sm:$0x3]
    %v85 = vlaneseq
    %v86 = vshrl.u32 %v85, 7
    %v87 = vsub.s32 0, %v86
    %v88 = vrot.slane %v83, %v87
    %v89 = vlaneseq
    %v90 = vshrl.u32 %v89, 7
    %v91 = vsub.s32 1, %v90
    %v92 = vrot.slane %v83, %v91
    %v111 = vunpack.c.l.b16 %v67
    %v112 = vunpack.c.h.b16 %v67
    %v113 = vunpack.c.l.b16 %v68
    %v114 = vunpack.c.h.b16 %v68
    %v115 = vunpack.c.l.b16 %v69
    %v116 = vunpack.c.h.b16 %v69
    %v117 = vunpack.c.l.b16 %v70
    %v118 = vunpack.c.h.b16 %v70
    %v119 = vunpack.c.l.b16 %v71
    %v120 = vunpack.c.h.b16 %v71
    %v121 = vunpack.c.l.b16 %v72
    %v122 = vunpack.c.h.b16 %v72
    %v123 = vunpack.c.l.b16 %v73
    %v124 = vunpack.c.h.b16 %v73
    %v125 = vunpack.c.l.b16 %v74
    %v126 = vunpack.c.h.b16 %v74
    %v127 = vunpack.c.l.b16 %v75
    %v128 = vunpack.c.h.b16 %v75
    %v129 = vunpack.c.l.b16 %v76
    %v130 = vunpack.c.h.b16 %v76
    %v131 = vunpack.c.l.b16 %v77
    %v132 = vunpack.c.h.b16 %v77
    %v133 = vunpack.c.l.b16 %v78
    %v134 = vunpack.c.h.b16 %v78
    %v135 = vunpack.c.l.b16 %v79
    %v136 = vunpack.c.h.b16 %v79
    %v137 = vunpack.c.l.b16 %v80
    %v138 = vunpack.c.h.b16 %v80
    %v139 = vunpack.c.l.b16 %v81
    %v140 = vunpack.c.h.b16 %v81
    %v141 = vunpack.c.l.b16 %v82
    %v142 = vunpack.c.h.b16 %v82
    %v143 = vpack.c.b16 %v113, %v111
    %v144 = vpack.c.b16 %v114, %v112
    %v145 = vpack.c.b16 %v117, %v115
    %v146 = vpack.c.b16 %v118, %v116
    %v147 = vpack.c.b16 %v121, %v119
    %v148 = vpack.c.b16 %v122, %v120
    %v149 = vpack.c.b16 %v125, %v123
    %v150 = vpack.c.b16 %v126, %v124
    %v151 = vpack.c.b16 %v129, %v127
    %v152 = vpack.c.b16 %v130, %v128
    %v153 = vpack.c.b16 %v133, %v131
    %v154 = vpack.c.b16 %v134, %v132
    %v155 = vpack.c.b16 %v137, %v135
    %v156 = vpack.c.b16 %v138, %v136
    %v157 = vpack.c.b16 %v141, %v139
    %v158 = vpack.c.b16 %v142, %v140
    %175 = vmatprep.subr.bf16.mxu0 %v158
    %176 = vmatpush1.bf16.msra.mxu0 %v157
    %177 = vmatprep.subr.bf16.mxu0 %v156
    %178 = vmatpush1.bf16.msra.mxu0 %v155
    %179 = vmatprep.subr.bf16.mxu0 %v154
    %180 = vmatpush1.bf16.msra.mxu0 %v153
    %181 = vmatprep.subr.bf16.mxu0 %v152
    %182 = vmatpush1.bf16.msra.mxu0 %v151
    %183 = vmatprep.subr.bf16.mxu0 %v150
    %184 = vmatpush1.bf16.msra.mxu0 %v149
    %185 = vmatprep.subr.bf16.mxu0 %v148
    %186 = vmatpush1.bf16.msra.mxu0 %v147
    %187 = vmatprep.subr.bf16.mxu0 %v146
    %188 = vmatpush1.bf16.msra.mxu0 %v145
    %189 = vmatprep.subr.bf16.mxu0 %v144
    %190 = vmatpush1.bf16.msra.mxu0 %v143
    %191 = vmatprep.subr.bf16.mxu0 0
    %192 = vmatpush2.bf16.msra.mxu0 0
    %193 = vmatprep.subr.bf16.mxu0 0
    %194 = vmatpush2.bf16.msra.mxu0 0
    %195 = vmatprep.subr.bf16.mxu0 0
    %196 = vmatpush2.bf16.msra.mxu0 0
    %197 = vmatprep.subr.bf16.mxu0 0
    %198 = vmatpush2.bf16.msra.mxu0 0
    %199 = vmatprep.subr.bf16.mxu0 0
    %200 = vmatpush2.bf16.msra.mxu0 0
    %201 = vmatprep.subr.bf16.mxu0 0
    %202 = vmatpush2.bf16.msra.mxu0 0
    %203 = vmatprep.subr.bf16.mxu0 0
    %204 = vmatpush2.bf16.msra.mxu0 0
    %205 = vmatprep.subr.bf16.mxu0 0
    %206 = vmatpush2.bf16.msra.mxu0 0
    %207 = vmatprep.mubr.bf16.mxu0 0
    %208 = vmatmul.mubr.bf16.gmra.mxu0 %v66
    %v209 = vpop.f32.mrf.mxu0
    %v210 = vadd.f32 %v88, %v209
    %v211 = vpop.f32.mrf.mxu0
    %v212 = vadd.f32 %v92, %v211
    %v213 = vpop.f32.mrf.mxu0
    %v214 = vpop.f32.mrf.mxu0
    %215 = vdwg.mxu0
    %v216 = vtanh.pop %v210
    %v217 = vtanh.pop %v212
    %v218 = vpack.c.bf16 %v216, %v216
    %v219 = vpack.c.bf16 %v217, %v217
    %v220 = vld [vmem:[#allocation5] sm:$0xff]
    %v221 = vld [vmem:[#allocation5 + $0x8] sm:$0xff]
    %v222 = vld [vmem:[#allocation5 + $0x10] sm:$0xff]
    %v223 = vld [vmem:[#allocation5 + $0x18] sm:$0xff]
    %v224 = vld [vmem:[#allocation5 + $0x20] sm:$0xff]
    %v225 = vld [vmem:[#allocation5 + $0x28] sm:$0xff]
    %v226 = vld [vmem:[#allocation5 + $0x30] sm:$0xff]
    %v227 = vld [vmem:[#allocation5 + $0x38] sm:$0xff]
    %v228 = vld [vmem:[#allocation5 + $0x40] sm:$0xff]
    %v229 = vld [vmem:[#allocation5 + $0x48] sm:$0xff]
    %v230 = vld [vmem:[#allocation5 + $0x50] sm:$0xff]
    %v231 = vld [vmem:[#allocation5 + $0x58] sm:$0xff]
    %v232 = vld [vmem:[#allocation5 + $0x60] sm:$0xff]
    %v233 = vld [vmem:[#allocation5 + $0x68] sm:$0xff]
    %v234 = vld [vmem:[#allocation5 + $0x70] sm:$0xff]
    %v235 = vld [vmem:[#allocation5 + $0x78] sm:$0xff]
    %v236 = vld [vmem:[#allocation5 + $0x80] sm:$0xff]
    %v237 = vld [vmem:[#allocation5 + $0x88] sm:$0xff]
    %v238 = vld [vmem:[#allocation5 + $0x90] sm:$0xff]
    %v239 = vld [vmem:[#allocation5 + $0x98] sm:$0xff]
    %v240 = vld [vmem:[#allocation5 + $0xa0] sm:$0xff]
    %v241 = vld [vmem:[#allocation5 + $0xa8] sm:$0xff]
    %v242 = vld [vmem:[#allocation5 + $0xb0] sm:$0xff]
    %v243 = vld [vmem:[#allocation5 + $0xb8] sm:$0xff]
    %v244 = vld [vmem:[#allocation5 + $0xc0] sm:$0xff]
    %v245 = vld [vmem:[#allocation5 + $0xc8] sm:$0xff]
    %v246 = vld [vmem:[#allocation5 + $0xd0] sm:$0xff]
    %v247 = vld [vmem:[#allocation5 + $0xd8] sm:$0xff]
    %v248 = vld [vmem:[#allocation5 + $0xe0] sm:$0xff]
    %v249 = vld [vmem:[#allocation5 + $0xe8] sm:$0xff]
    %v250 = vld [vmem:[#allocation5 + $0xf0] sm:$0xff]
    %v251 = vld [vmem:[#allocation5 + $0xf8] sm:$0xff]
    %v252 = vld [vmem:[#allocation7] sm:$0x3]
    %v254 = vlaneseq
    %v255 = vshrl.u32 %v254, 7
    %v256 = vsub.s32 0, %v255
    %v257 = vrot.slane %v252, %v256
    %v258 = vlaneseq
    %v259 = vshrl.u32 %v258, 7
    %v260 = vsub.s32 1, %v259
    %v261 = vrot.slane %v252, %v260
    %v296 = vunpack.c.l.b16 %v220
    %v297 = vunpack.c.h.b16 %v220
    %v298 = vunpack.c.l.b16 %v221
    %v299 = vunpack.c.h.b16 %v221
    %v300 = vunpack.c.l.b16 %v222
    %v301 = vunpack.c.h.b16 %v222
    %v302 = vunpack.c.l.b16 %v223
    %v303 = vunpack.c.h.b16 %v223
    %v304 = vunpack.c.l.b16 %v224
    %v305 = vunpack.c.h.b16 %v224
    %v306 = vunpack.c.l.b16 %v225
    %v307 = vunpack.c.h.b16 %v225
    %v308 = vunpack.c.l.b16 %v226
    %v309 = vunpack.c.h.b16 %v226
    %v310 = vunpack.c.l.b16 %v227
    %v311 = vunpack.c.h.b16 %v227
    %v312 = vunpack.c.l.b16 %v228
    %v313 = vunpack.c.h.b16 %v228
    %v314 = vunpack.c.l.b16 %v229
    %v315 = vunpack.c.h.b16 %v229
    %v316 = vunpack.c.l.b16 %v230
    %v317 = vunpack.c.h.b16 %v230
    %v318 = vunpack.c.l.b16 %v231
    %v319 = vunpack.c.h.b16 %v231
    %v320 = vunpack.c.l.b16 %v232
    %v321 = vunpack.c.h.b16 %v232
    %v322 = vunpack.c.l.b16 %v233
    %v323 = vunpack.c.h.b16 %v233
    %v324 = vunpack.c.l.b16 %v234
    %v325 = vunpack.c.h.b16 %v234
    %v326 = vunpack.c.l.b16 %v235
    %v327 = vunpack.c.h.b16 %v235
    %v328 = vunpack.c.l.b16 %v236
    %v329 = vunpack.c.h.b16 %v236
    %v330 = vunpack.c.l.b16 %v237
    %v331 = vunpack.c.h.b16 %v237
    %v332 = vunpack.c.l.b16 %v238
    %v333 = vunpack.c.h.b16 %v238
    %v334 = vunpack.c.l.b16 %v239
    %v335 = vunpack.c.h.b16 %v239
    %v336 = vunpack.c.l.b16 %v240
    %v337 = vunpack.c.h.b16 %v240
    %v338 = vunpack.c.l.b16 %v241
    %v339 = vunpack.c.h.b16 %v241
    %v340 = vunpack.c.l.b16 %v242
    %v341 = vunpack.c.h.b16 %v242
    %v342 = vunpack.c.l.b16 %v243
    %v343 = vunpack.c.h.b16 %v243
    %v344 = vunpack.c.l.b16 %v244
    %v345 = vunpack.c.h.b16 %v244
    %v346 = vunpack.c.l.b16 %v245
    %v347 = vunpack.c.h.b16 %v245
    %v348 = vunpack.c.l.b16 %v246
    %v349 = vunpack.c.h.b16 %v246
    %v350 = vunpack.c.l.b16 %v247
    %v351 = vunpack.c.h.b16 %v247
    %v352 = vunpack.c.l.b16 %v248
    %v353 = vunpack.c.h.b16 %v248
    %v354 = vunpack.c.l.b16 %v249
    %v355 = vunpack.c.h.b16 %v249
    %v356 = vunpack.c.l.b16 %v250
    %v357 = vunpack.c.h.b16 %v250
    %v358 = vunpack.c.l.b16 %v251
    %v359 = vunpack.c.h.b16 %v251
    %v360 = vpack.c.b16 %v298, %v296
    %v361 = vpack.c.b16 %v299, %v297
    %v362 = vpack.c.b16 %v302, %v300
    %v363 = vpack.c.b16 %v303, %v301
    %v364 = vpack.c.b16 %v306, %v304
    %v365 = vpack.c.b16 %v307, %v305
    %v366 = vpack.c.b16 %v310, %v308
    %v367 = vpack.c.b16 %v311, %v309
    %v368 = vpack.c.b16 %v314, %v312
    %v369 = vpack.c.b16 %v315, %v313
    %v370 = vpack.c.b16 %v318, %v316
    %v371 = vpack.c.b16 %v319, %v317
    %v372 = vpack.c.b16 %v322, %v320
    %v373 = vpack.c.b16 %v323, %v321
    %v374 = vpack.c.b16 %v326, %v324
    %v375 = vpack.c.b16 %v327, %v325
    %v376 = vpack.c.b16 %v330, %v328
    %v377 = vpack.c.b16 %v331, %v329
    %v378 = vpack.c.b16 %v334, %v332
    %v379 = vpack.c.b16 %v335, %v333
    %v380 = vpack.c.b16 %v338, %v336
    %v381 = vpack.c.b16 %v339, %v337
    %v382 = vpack.c.b16 %v342, %v340
    %v383 = vpack.c.b16 %v343, %v341
    %v384 = vpack.c.b16 %v346, %v344
    %v385 = vpack.c.b16 %v347, %v345
    %v386 = vpack.c.b16 %v350, %v348
    %v387 = vpack.c.b16 %v351, %v349
    %v388 = vpack.c.b16 %v354, %v352
    %v389 = vpack.c.b16 %v355, %v353
    %v390 = vpack.c.b16 %v358, %v356
    %v391 = vpack.c.b16 %v359, %v357
    %424 = vmatprep.subr.bf16.mxu0 %v375
    %425 = vmatpush1.bf16.msra.mxu0 %v374
    %426 = vmatprep.subr.bf16.mxu0 %v373
    %427 = vmatpush1.bf16.msra.mxu0 %v372
    %428 = vmatprep.subr.bf16.mxu0 %v371
    %429 = vmatpush1.bf16.msra.mxu0 %v370
    %430 = vmatprep.subr.bf16.mxu0 %v369
    %431 = vmatpush1.bf16.msra.mxu0 %v368
    %432 = vmatprep.subr.bf16.mxu0 %v367
    %433 = vmatpush1.bf16.msra.mxu0 %v366
    %434 = vmatprep.subr.bf16.mxu0 %v365
    %435 = vmatpush1.bf16.msra.mxu0 %v364
    %436 = vmatprep.subr.bf16.mxu0 %v363
    %437 = vmatpush1.bf16.msra.mxu0 %v362
    %438 = vmatprep.subr.bf16.mxu0 %v361
    %439 = vmatpush1.bf16.msra.mxu0 %v360
    %440 = vmatprep.subr.bf16.mxu0 %v391
    %441 = vmatpush2.bf16.msra.mxu0 %v390
    %442 = vmatprep.subr.bf16.mxu0 %v389
    %443 = vmatpush2.bf16.msra.mxu0 %v388
    %444 = vmatprep.subr.bf16.mxu0 %v387
    %445 = vmatpush2.bf16.msra.mxu0 %v386
    %446 = vmatprep.subr.bf16.mxu0 %v385
    %447 = vmatpush2.bf16.msra.mxu0 %v384
    %448 = vmatprep.subr.bf16.mxu0 %v383
    %449 = vmatpush2.bf16.msra.mxu0 %v382
    %450 = vmatprep.subr.bf16.mxu0 %v381
    %451 = vmatpush2.bf16.msra.mxu0 %v380
    %452 = vmatprep.subr.bf16.mxu0 %v379
    %453 = vmatpush2.bf16.msra.mxu0 %v378
    %454 = vmatprep.subr.bf16.mxu0 %v377
    %455 = vmatpush2.bf16.msra.mxu0 %v376
    %456 = vmatprep.mubr.bf16.mxu0 %v219
    %457 = vmatmul.mubr.bf16.gmra.mxu0 %v218
    %v458 = vpop.f32.mrf.mxu0
    %v459 = vadd.f32 %v257, %v458
    %v460 = vpop.f32.mrf.mxu0
    %v461 = vadd.f32 %v261, %v460
    %v462 = vpop.f32.mrf.mxu0
    %v463 = vpop.f32.mrf.mxu0
    %464 = vdwg.mxu0
    %v465 = vtanh.pop %v459
    %v466 = vtanh.pop %v461
    %v467 = vpack.c.bf16 %v465, %v465
    %v468 = vpack.c.bf16 %v466, %v466
    %v469 = vld [vmem:[%s5] sm:$0xf]
    %v470 = vld [vmem:[%s5 + $0x4] sm:$0xf]
    %v471 = vld [vmem:[%s5 + $0x8] sm:$0xf]
    %v472 = vld [vmem:[%s5 + $0xc] sm:$0xf]
    %v473 = vld [vmem:[%s5 + $0x10] sm:$0xf]
    %v474 = vld [vmem:[%s5 + $0x14] sm:$0xf]
    %v475 = vld [vmem:[%s5 + $0x18] sm:$0xf]
    %v476 = vld [vmem:[%s5 + $0x1c] sm:$0xf]
    %v477 = vld [vmem:[%s5 + $0x20] sm:$0xf]
    %v478 = vld [vmem:[%s5 + $0x24] sm:$0xf]
    %v479 = vld [vmem:[%s5 + $0x28] sm:$0xf]
    %v480 = vld [vmem:[%s5 + $0x2c] sm:$0xf]
    %v481 = vld [vmem:[%s5 + $0x30] sm:$0xf]
    %v482 = vld [vmem:[%s5 + $0x34] sm:$0xf]
    %v483 = vld [vmem:[%s5 + $0x38] sm:$0xf]
    %v484 = vld [vmem:[%s5 + $0x3c] sm:$0xf]
    %v485 = vld [vmem:[%s5 + $0x40] sm:$0xf]
    %v486 = vld [vmem:[%s5 + $0x44] sm:$0xf]
    %v487 = vld [vmem:[%s5 + $0x48] sm:$0xf]
    %v488 = vld [vmem:[%s5 + $0x4c] sm:$0xf]
    %v489 = vld [vmem:[%s5 + $0x50] sm:$0xf]
    %v490 = vld [vmem:[%s5 + $0x54] sm:$0xf]
    %v491 = vld [vmem:[%s5 + $0x58] sm:$0xf]
    %v492 = vld [vmem:[%s5 + $0x5c] sm:$0xf]
    %v493 = vld [vmem:[%s5 + $0x60] sm:$0xf]
    %v494 = vld [vmem:[%s5 + $0x64] sm:$0xf]
    %v495 = vld [vmem:[%s5 + $0x68] sm:$0xf]
    %v496 = vld [vmem:[%s5 + $0x6c] sm:$0xf]
    %v497 = vld [vmem:[%s5 + $0x70] sm:$0xf]
    %v498 = vld [vmem:[%s5 + $0x74] sm:$0xf]
    %v499 = vld [vmem:[%s5 + $0x78] sm:$0xf]
    %v500 = vld [vmem:[%s5 + $0x7c] sm:$0xf]
    %v501 = vld [vmem:[%s6] sm:$0x1]
    %v503 = vlaneseq
    %v504 = vshrl.u32 %v503, 7
    %v505 = vsub.s32 0, %v504
    %v506 = vrot.slane %v501, %v505
    %v540 = vunpack.c.l.b16 %v469
    %v541 = vunpack.c.l.b16 %v470
    %v542 = vunpack.c.l.b16 %v471
    %v543 = vunpack.c.l.b16 %v472
    %v544 = vunpack.c.l.b16 %v473
    %v545 = vunpack.c.l.b16 %v474
    %v546 = vunpack.c.l.b16 %v475
    %v547 = vunpack.c.l.b16 %v476
    %v548 = vunpack.c.l.b16 %v477
    %v549 = vunpack.c.l.b16 %v478
    %v550 = vunpack.c.l.b16 %v479
    %v551 = vunpack.c.l.b16 %v480
    %v552 = vunpack.c.l.b16 %v481
    %v553 = vunpack.c.l.b16 %v482
    %v554 = vunpack.c.l.b16 %v483
    %v555 = vunpack.c.l.b16 %v484
    %v556 = vunpack.c.l.b16 %v485
    %v557 = vunpack.c.l.b16 %v486
    %v558 = vunpack.c.l.b16 %v487
    %v559 = vunpack.c.l.b16 %v488
    %v560 = vunpack.c.l.b16 %v489
    %v561 = vunpack.c.l.b16 %v490
    %v562 = vunpack.c.l.b16 %v491
    %v563 = vunpack.c.l.b16 %v492
    %v564 = vunpack.c.l.b16 %v493
    %v565 = vunpack.c.l.b16 %v494
    %v566 = vunpack.c.l.b16 %v495
    %v567 = vunpack.c.l.b16 %v496
    %v568 = vunpack.c.l.b16 %v497
    %v569 = vunpack.c.l.b16 %v498
    %v570 = vunpack.c.l.b16 %v499
    %v571 = vunpack.c.l.b16 %v500
    %v572 = vpack.c.b16 %v541, %v540
    %v573 = vpack.c.b16 %v543, %v542
    %v574 = vpack.c.b16 %v545, %v544
    %v575 = vpack.c.b16 %v547, %v546
    %v576 = vpack.c.b16 %v549, %v548
    %v577 = vpack.c.b16 %v551, %v550
    %v578 = vpack.c.b16 %v553, %v552
    %v579 = vpack.c.b16 %v555, %v554
    %v580 = vpack.c.b16 %v557, %v556
    %v581 = vpack.c.b16 %v559, %v558
    %v582 = vpack.c.b16 %v561, %v560
    %v583 = vpack.c.b16 %v563, %v562
    %v584 = vpack.c.b16 %v565, %v564
    %v585 = vpack.c.b16 %v567, %v566
    %v586 = vpack.c.b16 %v569, %v568
    %v587 = vpack.c.b16 %v571, %v570
    %604 = vmatprep.subr.bf16.mxu0 0
    %605 = vmatpush1.bf16.msra.mxu0 %v579
    %606 = vmatprep.subr.bf16.mxu0 0
    %607 = vmatpush1.bf16.msra.mxu0 %v578
    %608 = vmatprep.subr.bf16.mxu0 0
    %609 = vmatpush1.bf16.msra.mxu0 %v577
    %610 = vmatprep.subr.bf16.mxu0 0
    %611 = vmatpush1.bf16.msra.mxu0 %v576
    %612 = vmatprep.subr.bf16.mxu0 0
    %613 = vmatpush1.bf16.msra.mxu0 %v575
    %614 = vmatprep.subr.bf16.mxu0 0
    %615 = vmatpush1.bf16.msra.mxu0 %v574
    %616 = vmatprep.subr.bf16.mxu0 0
    %617 = vmatpush1.bf16.msra.mxu0 %v573
    %618 = vmatprep.subr.bf16.mxu0 0
    %619 = vmatpush1.bf16.msra.mxu0 %v572
    %620 = vmatprep.subr.bf16.mxu0 0
    %621 = vmatpush2.bf16.msra.mxu0 %v587
    %622 = vmatprep.subr.bf16.mxu0 0
    %623 = vmatpush2.bf16.msra.mxu0 %v586
    %624 = vmatprep.subr.bf16.mxu0 0
    %625 = vmatpush2.bf16.msra.mxu0 %v585
    %626 = vmatprep.subr.bf16.mxu0 0
    %627 = vmatpush2.bf16.msra.mxu0 %v584
    %628 = vmatprep.subr.bf16.mxu0 0
    %629 = vmatpush2.bf16.msra.mxu0 %v583
    %630 = vmatprep.subr.bf16.mxu0 0
    %631 = vmatpush2.bf16.msra.mxu0 %v582
    %632 = vmatprep.subr.bf16.mxu0 0
    %633 = vmatpush2.bf16.msra.mxu0 %v581
    %634 = vmatprep.subr.bf16.mxu0 0
    %635 = vmatpush2.bf16.msra.mxu0 %v580
    %636 = vmatprep.mubr.bf16.mxu0 %v468
    %637 = vmatmul.mubr.bf16.gmra.mxu0 %v467
    %v638 = vpop.f32.mrf.mxu0
    %v639 = vadd.f32 %v506, %v638
    %v640 = vpop.f32.mrf.mxu0
    %v641 = vpop.f32.mrf.mxu0
    %v642 = vpop.f32.mrf.mxu0
    %643 = vdwg.mxu0
    %vm644 = vcmask 64512
    %645 = vst.msk [vmem:[#allocation8] sm:$0xff] %vm644, %v639
    // Predicated region
    $region42: #{tpu_custom_call.1} parent=1 // pred_check
      _
    $region43: #{tpu_custom_call.1} parent=1 // pred_check_branch
      %647 = sbr.rel (0) target = $region45
    $region44: #{tpu_custom_call.1} parent=1 // pred_region
      %s649 = ssub.s32 128, 128
      %650 = vsyncadd [#allocation4], %s649
      %s652 = sshll.u32 [#allocation8], 4
      %s653 = int_to_ptr.vmem [resolvable:$true] %s652
      %655 = dma.vmem_to_hbm [thread:$0]  %s653, 128, %s7, [#allocation4]
    $region45: #{tpu_custom_call.1} parent=1 // pred_fallthru
      _
    // Predicated region
    $region46: #{tpu_custom_call.1} parent=1 // pred_check
      _
    $region47: #{tpu_custom_call.1} parent=1 // pred_check_branch
      %657 = sbr.rel (0) target = $region49
    $region48: #{tpu_custom_call.1} parent=1 // pred_region
      %658 = dma.done [#allocation4], 128
    $region49: #{tpu_custom_call.1} parent=1 // pred_fallthru
      _
    %659 = vsyncpa [#allocation3], 1
    %660 = vsyncpa [#allocation6], 1
    %661 = vsyncpa [#allocation4], 1

</llo_original>
